<compile_context>
chip_gen: v6e
topology: v6e:2x2x1
jax: 0.10.0
libtpu: 0.0.40
codegen_flags: <defaults>
</compile_context>

<pallas_src>
import jax
import jax.numpy as jnp
from jax.experimental import pallas as pl
from jax.experimental.pallas import tpu as pltpu

SIZELAT = 5


def _round_up(n, m):
    return ((n + m - 1) // m) * m


def _weight_layout(nbf):
    """Column layout of the two packed parameter arrays (128-aligned segments)."""
    S = SIZELAT
    # matrix pack: (name, rows, cols)
    wdefs = [("w1x", nbf, 128), ("w11", 128, 64), ("w12", 64, 32),
             ("w2", 32, 2 * S), ("w3z", S, 60), ("w4", 60, nbf + 1)]
    # row-vector pack: (name, cols)
    rdefs = [("b1", 128), ("w1a", 128), ("w1y", 128), ("b11", 64), ("b12", 32),
             ("b2", 2 * S), ("w3a", 60), ("b3", 60), ("b4", nbf + 1)]
    woffs, off = {}, 0
    for name, rows, cols in wdefs:
        woffs[name] = (off, rows, cols)
        off += _round_up(cols, 128)
    wcols = off
    wrows = _round_up(max(nbf, 128), 8)
    roffs, off = {}, 0
    for name, cols in rdefs:
        roffs[name] = (off, cols)
        off += _round_up(cols, 128)
    rcols = off
    return woffs, (wrows, wcols), roffs, rcols


def _make_vae_kernel(nbf, woffs, roffs):
    S = SIZELAT

    def w(ref, name):
        off, rows, cols = woffs[name]
        return ref[0:rows, off:off + cols]

    def r(ref, name):
        off, cols = roffs[name]
        return ref[:, off:off + cols]

    def kernel(x_ref, aye_ref, wpack_ref, rowpack_ref, out_ref):
        f32 = jnp.float32
        x = x_ref[...].astype(f32)
        aye = aye_ref[...].astype(f32)
        a = aye[:, 0:1]
        y = aye[:, 1:2]
        eps = aye[:, 2:2 + S]

        # ---- encode: fc1(cat([x, a, y], 1)) without materializing the concat ----
        h = jnp.dot(x, w(wpack_ref, "w1x"), preferred_element_type=f32)
        h = (h + a * r(rowpack_ref, "w1a") + y * r(rowpack_ref, "w1y")
             + r(rowpack_ref, "b1"))
        h = jnp.maximum(h, 0.0)
        h = jnp.maximum(jnp.dot(h, w(wpack_ref, "w11"), preferred_element_type=f32)
                        + r(rowpack_ref, "b11"), 0.0)
        h1 = jnp.maximum(jnp.dot(h, w(wpack_ref, "w12"), preferred_element_type=f32)
                         + r(rowpack_ref, "b12"), 0.0)

        # fused mu/logvar head: enc = [mu | logvar]
        enc = (jnp.dot(h1, w(wpack_ref, "w2"), preferred_element_type=f32)
               + r(rowpack_ref, "b2"))
        mu = enc[:, :S]
        logvar = enc[:, S:]

        # ---- reparameterize ----
        z = mu + eps * jnp.exp(0.5 * logvar)

        # ---- decode: fc3(cat([z, a], 1)) == z @ W3z + a * w3a_row + b3 ----
        h3 = jnp.dot(z, w(wpack_ref, "w3z"), preferred_element_type=f32)
        h3 = jnp.maximum(h3 + a * r(rowpack_ref, "w3a") + r(rowpack_ref, "b3"), 0.0)

        # fused decoder head: dec = [logits_X | recon_Y]
        dec = (jnp.dot(h3, w(wpack_ref, "w4"), preferred_element_type=f32)
               + r(rowpack_ref, "b4"))

        # sigmoid on the first nbf columns only (VPU select, no lane slicing of dec).
        # exp -> EUP, approx reciprocal -> EUP (free bundle slot).
        col = jax.lax.broadcasted_iota(jnp.int32, dec.shape, 1)
        sig = pl.reciprocal(1.0 + jnp.exp(-dec), approx=True)
        dec_out = jnp.where(col < nbf, sig, dec)

        # single lane-contiguous store: [recon_X | recon_Y | z | mu | logvar]
        out_ref[...] = jnp.concatenate([dec_out, z, enc], axis=1).astype(out_ref.dtype)

    return kernel


def _linear_params(key, fan_in, fan_out):
    """torch.nn.Linear default init: U(-1/sqrt(fan_in), 1/sqrt(fan_in))."""
    kw, kb = jax.random.split(key)
    bound = 1.0 / (float(fan_in) ** 0.5)
    # stored as (in, out) so the kernel computes x @ W
    wgt = jax.random.uniform(kw, (fan_in, fan_out), jnp.float32, -bound, bound)
    b = jax.random.uniform(kb, (1, fan_out), jnp.float32, -bound, bound)
    return wgt, b


def init_vae_params(key, nb_features):
    S = SIZELAT
    keys = jax.random.split(key, 8)
    p = {"nb_features": int(nb_features)}
    w1, p["b1"] = _linear_params(keys[0], nb_features + 2, 128)
    p["w1x"] = w1[:nb_features, :]
    p["w1a"] = w1[nb_features:nb_features + 1, :]
    p["w1y"] = w1[nb_features + 1:, :]
    p["w11"], p["b11"] = _linear_params(keys[1], 128, 64)
    p["w12"], p["b12"] = _linear_params(keys[2], 64, 32)
    w21, b21 = _linear_params(keys[3], 32, S)
    w22, b22 = _linear_params(keys[4], 32, S)
    p["w2"] = jnp.concatenate([w21, w22], axis=1)        # (32, 2*sizelat)
    p["b2"] = jnp.concatenate([b21, b22], axis=1)
    w3, p["b3"] = _linear_params(keys[5], S + 1, 60)
    p["w3z"] = w3[:S, :]
    p["w3a"] = w3[S:, :]
    w41, b41 = _linear_params(keys[6], 60, nb_features)
    w42, b42 = _linear_params(keys[7], 60, 1)
    p["w4"] = jnp.concatenate([w41, w42], axis=1)        # (60, nb_features+1)
    p["b4"] = jnp.concatenate([b41, b42], axis=1)

    # ---- pack all parameters into 2 kernel inputs (128-lane aligned segments) ----
    woffs, (wrows, wcols), roffs, rcols = _weight_layout(nb_features)
    wpack = jnp.zeros((wrows, wcols), jnp.float32)
    for name in ("w1x", "w11", "w12", "w2", "w3z", "w4"):
        off, rows, cols = woffs[name]
        wpack = wpack.at[:rows, off:off + cols].set(p[name])
    rowpack = jnp.zeros((1, rcols), jnp.float32)
    for name in ("b1", "w1a", "w1y", "b11", "b12", "b2", "w3a", "b3", "b4"):
        off, cols = roffs[name]
        rowpack = rowpack.at[:, off:off + cols].set(p[name])
    p["wpack"] = wpack
    p["rowpack"] = rowpack
    return p


def _vmem_estimate_bytes(tb, nbf, wpack_elems, rowpack_elems, io_bytes):
    S = SIZELAT
    in_cols = nbf + 2 + S
    out_cols = nbf + 1 + 3 * S
    io = 2 * tb * (in_cols + out_cols) * io_bytes          # double-buffered I/O tiles
    acts = tb * (128 + 64 + 32 + 2 * S + 60 + (nbf + 1) + S + out_cols) * 4
    weights = 2 * (wpack_elems + rowpack_elems) * 4        # packed params (x2 buffers)
    return io + acts + weights


def vae_forward(params, x, a, y, eps, *, io_dtype=jnp.float32):
    """Pallas VAE forward. Returns (recon_X, z, recon_Y, mu, logvar).

    io_dtype=jnp.bfloat16 halves the streamed HBM bytes (useful on v5e/v6e);
    default is float32 to keep outputs bit-comparable to the reference.
    """
    nbf = int(params["nb_features"])
    S = SIZELAT
    woffs, _, roffs, _ = _weight_layout(nbf)
    B = x.shape[0]
    x2 = x.reshape(B, nbf).astype(io_dtype)
    aye = jnp.concatenate(
        [a.reshape(B, 1), y.reshape(B, 1), eps.reshape(B, S)], axis=1
    ).astype(io_dtype)

    # Batch tile: large cap (per-step VMEM need is tiny), but guarantee >= 2 grid
    # steps when a single tile would cover B so both v7x TensorCores get work.
    TB = min(2048, _round_up(B, 8))
    if TB >= B and B > 8:
        TB = _round_up(pl.cdiv(B, 2), 8)
    Bp = _round_up(B, TB)
    if Bp != B:
        pad = Bp - B
        x2 = jnp.pad(x2, ((0, pad), (0, 0)))
        aye = jnp.pad(aye, ((0, pad), (0, 0)))
    grid = (Bp // TB,)

    out_cols = nbf + 1 + 3 * S   # [recon_X | recon_Y | z | mu | logvar]

    def batch_spec(width):
        return pl.BlockSpec((TB, width), lambda i: (i, 0))

    def const_spec(arr):
        return pl.BlockSpec(arr.shape, lambda i: (0, 0))

    wpack = params["wpack"]
    rowpack = params["rowpack"]

    io_bytes = jnp.dtype(io_dtype).itemsize
    est = _vmem_estimate_bytes(TB, nbf, wpack.size, rowpack.size, io_bytes)
    vmem_limit = int(min(max(2 * est, 8 * 1024 * 1024), 64 * 1024 * 1024))

    kernel = _make_vae_kernel(nbf, woffs, roffs)
    out = pl.pallas_call(
        kernel,
        grid=grid,
        out_shape=jax.ShapeDtypeStruct((Bp, out_cols), io_dtype),
        in_specs=[batch_spec(nbf), batch_spec(2 + S),
                  const_spec(wpack), const_spec(rowpack)],
        out_specs=batch_spec(out_cols),
        compiler_params=pltpu.CompilerParams(
            dimension_semantics=("parallel",),
            vmem_limit_bytes=vmem_limit),
    )(x2, aye, wpack, rowpack)

    out = out[:B].astype(jnp.float32)
    recon_x = out[:, :nbf]
    recon_y = out[:, nbf:nbf + 1]
    z = out[:, nbf + 1:nbf + 1 + S]
    mu = out[:, nbf + 1 + S:nbf + 1 + 2 * S]
    logvar = out[:, nbf + 1 + 2 * S:]
    return recon_x, z, recon_y, mu, logvar


def _vae_forward_ref(params, x, a, y, eps):
    """Pure-JAX reference (mirrors the original torch module)."""
    B = x.shape[0]
    nbf = int(params["nb_features"])
    xv = x.reshape(B, nbf)
    av = a.reshape(B, 1)
    yv = y.reshape(B, 1)
    w1 = jnp.concatenate([params["w1x"], params["w1a"], params["w1y"]], axis=0)
    xay = jnp.concatenate([xv, av, yv], axis=1)
    h = jax.nn.relu(xay @ w1 + params["b1"])
    h = jax.nn.relu(h @ params["w11"] + params["b11"])
    h1 = jax.nn.relu(h @ params["w12"] + params["b12"])
    enc = h1 @ params["w2"] + params["b2"]
    mu, logvar = enc[:, :SIZELAT], enc[:, SIZELAT:]
    z = mu + eps * jnp.exp(0.5 * logvar)
    w3 = jnp.concatenate([params["w3z"], params["w3a"]], axis=0)
    za = jnp.concatenate([z, av], axis=1)
    h3 = jax.nn.relu(za @ w3 + params["b3"])
    dec = h3 @ params["w4"] + params["b4"]
    recon_x = jax.nn.sigmoid(dec[:, :nbf])
    recon_y = dec[:, nbf:]
    return recon_x, z, recon_y, mu, logvar


if __name__ == "__main__":
    nb_features = 16

    key = jax.random.PRNGKey(0)
    k_param, k_data = jax.random.split(key)
    params = init_vae_params(k_param, nb_features)

    # batch=8 -> single grid step; batch=300 -> 2 steps (padded, megacore path)
    for batch in (8, 300):
        kx, ka, ky, ke = jax.random.split(jax.random.fold_in(k_data, batch), 4)
        x = jax.random.normal(kx, (batch, nb_features), jnp.float32)
        a = jax.random.normal(ka, (batch, 1), jnp.float32)
        y = jax.random.normal(ky, (batch, 1), jnp.float32)
        eps = jax.random.normal(ke, (batch, SIZELAT), jnp.float32)  # torch.randn_like(std)

        outs = jax.block_until_ready(vae_forward(params, x, a, y, eps))
        refs = _vae_forward_ref(params, x, a, y, eps)

        # recon_X uses the EUP approximate reciprocal inside the sigmoid ->
        # slightly looser tolerance; everything else is exact-path f32.
        tols = (2e-3, 1e-4, 1e-4, 1e-4, 1e-4)
        for o, r, tol in zip(outs, refs, tols):
            assert o.shape == r.shape and o.dtype == r.dtype
            err = float(jnp.max(jnp.abs(o - r)))
            assert err < tol, (batch, o.shape, err)

    print("KERNEL_OK")
</pallas_src>

<mosaic_0001>
module attributes {stable_mosaic.version = 11 : i64} {
  func.func @kernel(%arg0: i32, %arg1: memref<8x16xf32, #tpu.memory_space<vmem>>, %arg2: memref<8x7xf32, #tpu.memory_space<vmem>>, %arg3: memref<128x768xf32, #tpu.memory_space<vmem>>, %arg4: memref<1x1152xf32, #tpu.memory_space<vmem>>, %arg5: memref<8x32xf32, #tpu.memory_space<vmem>>) attributes {dimension_semantics = [#tpu.dimension_semantics<parallel>], iteration_bounds = array<i64: 1>, scalar_prefetch = 0 : i64, scratch_operands = 0 : i64, tpu.core_type = #tpu.core_type<tc>, window_params = [{transform_indices = @transform_0, window_bounds = array<i64: 8, 16>}, {transform_indices = @transform_1, window_bounds = array<i64: 8, 7>}, {pipeline_mode = #tpu.pipeline_mode<synchronous>, transform_indices = @transform_2, window_bounds = array<i64: 128, 768>}, {pipeline_mode = #tpu.pipeline_mode<synchronous>, transform_indices = @transform_3, window_bounds = array<i64: 1, 1152>}, {transform_indices = @transform_4, window_bounds = array<i64: 8, 32>}]} {
    %c0 = arith.constant 0 : index
    %c0_0 = arith.constant 0 : index
    %0 = vector.load %arg1[%c0, %c0_0] : memref<8x16xf32, #tpu.memory_space<vmem>>, vector<8x16xf32>
    %c0_1 = arith.constant 0 : index
    %c0_2 = arith.constant 0 : index
    %1 = vector.load %arg2[%c0_1, %c0_2] : memref<8x7xf32, #tpu.memory_space<vmem>>, vector<8x7xf32>
    %2 = vector.extract_strided_slice %1 {offsets = [0, 0], sizes = [8, 1], strides = [1, 1]} : vector<8x7xf32> to vector<8x1xf32>
    %3 = vector.extract_strided_slice %1 {offsets = [0, 1], sizes = [8, 1], strides = [1, 1]} : vector<8x7xf32> to vector<8x1xf32>
    %4 = vector.extract_strided_slice %1 {offsets = [0, 2], sizes = [8, 5], strides = [1, 1]} : vector<8x7xf32> to vector<8x5xf32>
    %c0_3 = arith.constant 0 : index
    %c0_4 = arith.constant 0 : index
    %5 = vector.load %arg3[%c0_3, %c0_4] : memref<128x768xf32, #tpu.memory_space<vmem>>, vector<16x128xf32>
    %cst = arith.constant dense<0.000000e+00> : vector<8x128xf32>
    %6 = tpu.matmul %0, %5, %cst {dimension_numbers = #tpu.dot_dimension_numbers<[1], [0], [0], [1], [0, 0, 1, 1], [], []>} : vector<8x16xf32>, vector<16x128xf32>, vector<8x128xf32> -> vector<8x128xf32>
    %c0_5 = arith.constant 0 : index
    %c128 = arith.constant 128 : index
    %7 = vector.load %arg4[%c0_5, %c128] : memref<1x1152xf32, #tpu.memory_space<vmem>>, vector<1x128xf32>
    %8 = vector.broadcast %2 : vector<8x1xf32> to vector<8x128xf32>
    %9 = vector.broadcast %7 : vector<1x128xf32> to vector<8x128xf32>
    %10 = arith.mulf %8, %9 : vector<8x128xf32>
    %11 = arith.addf %6, %10 : vector<8x128xf32>
    %c0_6 = arith.constant 0 : index
    %c256 = arith.constant 256 : index
    %12 = vector.load %arg4[%c0_6, %c256] : memref<1x1152xf32, #tpu.memory_space<vmem>>, vector<1x128xf32>
    %13 = vector.broadcast %3 : vector<8x1xf32> to vector<8x128xf32>
    %14 = vector.broadcast %12 : vector<1x128xf32> to vector<8x128xf32>
    %15 = arith.mulf %13, %14 : vector<8x128xf32>
    %16 = arith.addf %11, %15 : vector<8x128xf32>
    %c0_7 = arith.constant 0 : index
    %c0_8 = arith.constant 0 : index
    %17 = vector.load %arg4[%c0_7, %c0_8] : memref<1x1152xf32, #tpu.memory_space<vmem>>, vector<1x128xf32>
    %18 = vector.broadcast %17 : vector<1x128xf32> to vector<8x128xf32>
    %19 = arith.addf %16, %18 : vector<8x128xf32>
    %cst_9 = arith.constant 0.000000e+00 : f32
    %20 = vector.broadcast %cst_9 : f32 to vector<8x128xf32>
    %21 = arith.maximumf %19, %20 : vector<8x128xf32>
    %c0_10 = arith.constant 0 : index
    %c128_11 = arith.constant 128 : index
    %22 = vector.load %arg3[%c0_10, %c128_11] : memref<128x768xf32, #tpu.memory_space<vmem>>, vector<128x64xf32>
    %cst_12 = arith.constant dense<0.000000e+00> : vector<8x64xf32>
    %23 = tpu.matmul %21, %22, %cst_12 {dimension_numbers = #tpu.dot_dimension_numbers<[1], [0], [0], [1], [0, 0, 1, 1], [], []>} : vector<8x128xf32>, vector<128x64xf32>, vector<8x64xf32> -> vector<8x64xf32>
    %c0_13 = arith.constant 0 : index
    %c384 = arith.constant 384 : index
    %24 = vector.load %arg4[%c0_13, %c384] : memref<1x1152xf32, #tpu.memory_space<vmem>>, vector<1x64xf32>
    %25 = vector.broadcast %24 : vector<1x64xf32> to vector<8x64xf32>
    %26 = arith.addf %23, %25 : vector<8x64xf32>
    %cst_14 = arith.constant 0.000000e+00 : f32
    %27 = vector.broadcast %cst_14 : f32 to vector<8x64xf32>
    %28 = arith.maximumf %26, %27 : vector<8x64xf32>
    %c0_15 = arith.constant 0 : index
    %c256_16 = arith.constant 256 : index
    %29 = vector.load %arg3[%c0_15, %c256_16] : memref<128x768xf32, #tpu.memory_space<vmem>>, vector<64x32xf32>
    %cst_17 = arith.constant dense<0.000000e+00> : vector<8x32xf32>
    %30 = tpu.matmul %28, %29, %cst_17 {dimension_numbers = #tpu.dot_dimension_numbers<[1], [0], [0], [1], [0, 0, 1, 1], [], []>} : vector<8x64xf32>, vector<64x32xf32>, vector<8x32xf32> -> vector<8x32xf32>
    %c0_18 = arith.constant 0 : index
    %c512 = arith.constant 512 : index
    %31 = vector.load %arg4[%c0_18, %c512] : memref<1x1152xf32, #tpu.memory_space<vmem>>, vector<1x32xf32>
    %32 = vector.broadcast %31 : vector<1x32xf32> to vector<8x32xf32>
    %33 = arith.addf %30, %32 : vector<8x32xf32>
    %cst_19 = arith.constant 0.000000e+00 : f32
    %34 = vector.broadcast %cst_19 : f32 to vector<8x32xf32>
    %35 = arith.maximumf %33, %34 : vector<8x32xf32>
    %c0_20 = arith.constant 0 : index
    %c384_21 = arith.constant 384 : index
    %36 = vector.load %arg3[%c0_20, %c384_21] : memref<128x768xf32, #tpu.memory_space<vmem>>, vector<32x10xf32>
    %cst_22 = arith.constant dense<0.000000e+00> : vector<8x10xf32>
    %37 = tpu.matmul %35, %36, %cst_22 {dimension_numbers = #tpu.dot_dimension_numbers<[1], [0], [0], [1], [0, 0, 1, 1], [], []>} : vector<8x32xf32>, vector<32x10xf32>, vector<8x10xf32> -> vector<8x10xf32>
    %c0_23 = arith.constant 0 : index
    %c640 = arith.constant 640 : index
    %38 = vector.load %arg4[%c0_23, %c640] : memref<1x1152xf32, #tpu.memory_space<vmem>>, vector<1x10xf32>
    %39 = vector.broadcast %38 : vector<1x10xf32> to vector<8x10xf32>
    %40 = arith.addf %37, %39 : vector<8x10xf32>
    %41 = vector.extract_strided_slice %40 {offsets = [0, 0], sizes = [8, 5], strides = [1, 1]} : vector<8x10xf32> to vector<8x5xf32>
    %42 = vector.extract_strided_slice %40 {offsets = [0, 5], sizes = [8, 5], strides = [1, 1]} : vector<8x10xf32> to vector<8x5xf32>
    %cst_24 = arith.constant 5.000000e-01 : f32
    %43 = vector.broadcast %cst_24 : f32 to vector<8x5xf32>
    %44 = arith.mulf %43, %42 : vector<8x5xf32>
    %45 = math.exp %44 : vector<8x5xf32>
    %46 = arith.mulf %4, %45 : vector<8x5xf32>
    %47 = arith.addf %41, %46 : vector<8x5xf32>
    %c0_25 = arith.constant 0 : index
    %c512_26 = arith.constant 512 : index
    %48 = vector.load %arg3[%c0_25, %c512_26] : memref<128x768xf32, #tpu.memory_space<vmem>>, vector<5x60xf32>
    %cst_27 = arith.constant dense<0.000000e+00> : vector<8x60xf32>
    %49 = tpu.matmul %47, %48, %cst_27 {dimension_numbers = #tpu.dot_dimension_numbers<[1], [0], [0], [1], [0, 0, 1, 1], [], []>} : vector<8x5xf32>, vector<5x60xf32>, vector<8x60xf32> -> vector<8x60xf32>
    %c0_28 = arith.constant 0 : index
    %c768 = arith.constant 768 : index
    %50 = vector.load %arg4[%c0_28, %c768] : memref<1x1152xf32, #tpu.memory_space<vmem>>, vector<1x60xf32>
    %51 = vector.broadcast %2 : vector<8x1xf32> to vector<8x60xf32>
    %52 = vector.broadcast %50 : vector<1x60xf32> to vector<8x60xf32>
    %53 = arith.mulf %51, %52 : vector<8x60xf32>
    %54 = arith.addf %49, %53 : vector<8x60xf32>
    %c0_29 = arith.constant 0 : index
    %c896 = arith.constant 896 : index
    %55 = vector.load %arg4[%c0_29, %c896] : memref<1x1152xf32, #tpu.memory_space<vmem>>, vector<1x60xf32>
    %56 = vector.broadcast %55 : vector<1x60xf32> to vector<8x60xf32>
    %57 = arith.addf %54, %56 : vector<8x60xf32>
    %cst_30 = arith.constant 0.000000e+00 : f32
    %58 = vector.broadcast %cst_30 : f32 to vector<8x60xf32>
    %59 = arith.maximumf %57, %58 : vector<8x60xf32>
    %c0_31 = arith.constant 0 : index
    %c640_32 = arith.constant 640 : index
    %60 = vector.load %arg3[%c0_31, %c640_32] : memref<128x768xf32, #tpu.memory_space<vmem>>, vector<60x17xf32>
    %cst_33 = arith.constant dense<0.000000e+00> : vector<8x17xf32>
    %61 = tpu.matmul %59, %60, %cst_33 {dimension_numbers = #tpu.dot_dimension_numbers<[1], [0], [0], [1], [0, 0, 1, 1], [], []>} : vector<8x60xf32>, vector<60x17xf32>, vector<8x17xf32> -> vector<8x17xf32>
    %c0_34 = arith.constant 0 : index
    %c1024 = arith.constant 1024 : index
    %62 = vector.load %arg4[%c0_34, %c1024] : memref<1x1152xf32, #tpu.memory_space<vmem>>, vector<1x17xf32>
    %63 = vector.broadcast %62 : vector<1x17xf32> to vector<8x17xf32>
    %64 = arith.addf %61, %63 : vector<8x17xf32>
    %65 = tpu.iota {dimensions = array<i32: 1>} : vector<8x17xi32>
    %cst_35 = arith.constant 0.000000e+00 : f32
    %66 = vector.broadcast %cst_35 : f32 to vector<8x17xf32>
    %67 = arith.subf %66, %64 : vector<8x17xf32>
    %68 = math.exp %67 : vector<8x17xf32>
    %cst_36 = arith.constant 1.000000e+00 : f32
    %69 = vector.broadcast %cst_36 : f32 to vector<8x17xf32>
    %70 = arith.addf %69, %68 : vector<8x17xf32>
    %71 = tpu.reciprocal %70 {approx = true} : vector<8x17xf32> -> vector<8x17xf32>
    %c16_i32 = arith.constant 16 : i32
    %72 = vector.broadcast %c16_i32 : i32 to vector<8x17xi32>
    %73 = arith.cmpi slt, %65, %72 : vector<8x17xi32>
    %74 = arith.select %73, %71, %64 : vector<8x17xi1>, vector<8x17xf32>
    %75 = tpu.concatenate %74, %47, %40 in 1 : vector<8x17xf32>, vector<8x5xf32>, vector<8x10xf32> -> vector<8x32xf32>
    %c0_37 = arith.constant 0 : index
    %c0_38 = arith.constant 0 : index
    %76 = vector.load %arg5[%c0_37, %c0_38] : memref<8x32xf32, #tpu.memory_space<vmem>>, vector<8x32xf32>
    tpu.vector_store %arg5[%c0_37, %c0_38], %75 {strides = array<i32>} : memref<8x32xf32, #tpu.memory_space<vmem>>, vector<8x32xf32>,
    return
  }
  func.func @transform_0(%arg0: i32) -> (i32, i32) {
    %c0_i32 = arith.constant 0 : i32
    %c0_i32_0 = arith.constant 0 : i32
    return %arg0, %c0_i32 : i32, i32
  }
  func.func @transform_1(%arg0: i32) -> (i32, i32) {
    %c0_i32 = arith.constant 0 : i32
    %c0_i32_0 = arith.constant 0 : i32
    return %arg0, %c0_i32 : i32, i32
  }
  func.func @transform_2(%arg0: i32) -> (i32, i32) {
    %c0_i32 = arith.constant 0 : i32
    %c0_i32_0 = arith.constant 0 : i32
    %c0_i32_1 = arith.constant 0 : i32
    return %c0_i32, %c0_i32_0 : i32, i32
  }
  func.func @transform_3(%arg0: i32) -> (i32, i32) {
    %c0_i32 = arith.constant 0 : i32
    %c0_i32_0 = arith.constant 0 : i32
    %c0_i32_1 = arith.constant 0 : i32
    return %c0_i32, %c0_i32_0 : i32, i32
  }
  func.func @transform_4(%arg0: i32) -> (i32, i32) {
    %c0_i32 = arith.constant 0 : i32
    %c0_i32_0 = arith.constant 0 : i32
    return %arg0, %c0_i32 : i32, i32
  }
}

</mosaic_0001>

<llo_original>
// kernel: tpu_custom_call.1
$region0: #{tpu_custom_call.1}
  #allocation0 [shape = 'u32[]', space=smem, size = 0x4, offset = 0x4, fixed_abs, tag = 'smem constant byte address 0x4 - core index']
  #allocation1 [shape = 'u32[144,128]{1,0:T(1,128)}', space=vmem, size = 0x12000, scoped, tag = 'internal scratch']
  %s0 = inlined_call_operand.hbm [shape: f32[8,16], index: 0, kind: input, shape index: {}]
  %s1 = inlined_call_operand.hbm [shape: f32[8,7], index: 1, kind: input, shape index: {}]
  %s2 = inlined_call_operand.hbm [shape: f32[128,768], index: 2, kind: input, shape index: {}]
  %s3 = inlined_call_operand.hbm [shape: f32[1,1152], index: 3, kind: input, shape index: {}]
  %s4 = inlined_call_operand.hbm [shape: f32[8,32], index: 4, kind: output, shape index: {}]
  %s5 = sld [smem:[#allocation0]]
  $region42: #{tpu_custom_call.1} parent=0
    _
  %s7 = ssub.s32 1, %s5
  %s8 = scalar_select 0, %s7, %s5
  $region1: #{tpu_custom_call.1} parent=0
    #allocation2 [shape = 'u8[4096]{0}', space=vmem, size = 0x1000, scoped, tag = 'input window, operand 0, single buffered']
    #allocation3 [shape = 's32[1]{0}', space=sflag, size = 0x4, scoped, tag = 'scoped memory for tpu_custom_call.1']
    #allocation4 [shape = 's32[1]{0}', space=sflag, size = 0x4, scoped, tag = 'scoped memory for tpu_custom_call.1']
    #allocation5 [shape = 'u8[4096]{0}', space=vmem, size = 0x1000, scoped, tag = 'input window, operand 1, single buffered']
    #allocation6 [shape = 's32[1]{0}', space=sflag, size = 0x4, scoped, tag = 'scoped memory for tpu_custom_call.1']
    #allocation7 [shape = 'u8[393216]{0}', space=vmem, size = 0x60000, scoped, tag = 'input window, operand 2, single buffered']
    #allocation8 [shape = 'u8[4608]{0}', space=vmem, size = 0x1400, scoped, tag = 'input window, operand 3, single buffered']
    #allocation9 [shape = 's32[1]{0}', space=sflag, size = 0x4, scoped, tag = 'scoped memory for tpu_custom_call.1']
    #allocation10 [shape = 'u8[4096]{0}', space=vmem, size = 0x1000, scoped, tag = 'output window, operand 0, single buffered']
    %9 = vsyncpa [#allocation3], 0
    %10 = vsyncpa [#allocation6], 0
    %11 = vsyncpa [#allocation9], 0
    %12 = vsyncpa [#allocation4], 0
    // Predicated region
    $region2: #{tpu_custom_call.1} parent=1 // pred_check
      _
    $region3: #{tpu_custom_call.1} parent=1 // pred_check_branch
      %14 = sbr.rel (0) target = $region5
    $region4: #{tpu_custom_call.1} parent=1 // pred_region
      %s16 = ssub.s32 128, 128
      %17 = vsyncadd [#allocation3], %s16
      %s19 = sshll.u32 [#allocation2], 4
      %s20 = int_to_ptr.vmem [resolvable:$true] %s19
      %22 = dma.hbm_to_vmem [thread:$0]  %s0, 128, %s20, [#allocation3]
    $region5: #{tpu_custom_call.1} parent=1 // pred_fallthru
      _
    // Predicated region
    $region6: #{tpu_custom_call.1} parent=1 // pred_check
      _
    $region7: #{tpu_custom_call.1} parent=1 // pred_check_branch
      %24 = sbr.rel (0) target = $region9
    $region8: #{tpu_custom_call.1} parent=1 // pred_region
      %s26 = ssub.s32 128, 128
      %27 = vsyncadd [#allocation6], %s26
      %s29 = sshll.u32 [#allocation5], 4
      %s30 = int_to_ptr.vmem [resolvable:$true] %s29
      %32 = dma.hbm_to_vmem [thread:$0]  %s1, 128, %s30, [#allocation6]
    $region9: #{tpu_custom_call.1} parent=1 // pred_fallthru
      _
    // Predicated region
    $region10: #{tpu_custom_call.1} parent=1 // pred_check
      _
    $region11: #{tpu_custom_call.1} parent=1 // pred_check_branch
      %34 = sbr.rel (0) target = $region13
    $region12: #{tpu_custom_call.1} parent=1 // pred_region
      %s36 = ssub.s32 12288, 12288
      %37 = vsyncadd [#allocation6], %s36
      %s38 = sshll.u32 [#allocation7], 4
      %s39 = int_to_ptr.vmem [resolvable:$true] %s38
      %44 = dma.hbm_to_vmem [thread:$0]  %s2, 12288, %s39, [#allocation6], 768, 768, 48
    $region13: #{tpu_custom_call.1} parent=1 // pred_fallthru
      _
    // Predicated region
    $region14: #{tpu_custom_call.1} parent=1 // pred_check
      _
    $region15: #{tpu_custom_call.1} parent=1 // pred_check_branch
      %46 = sbr.rel (0) target = $region17
    $region16: #{tpu_custom_call.1} parent=1 // pred_region
      %s48 = ssub.s32 144, 144
      %49 = vsyncadd [#allocation9], %s48
      %s51 = sshll.u32 [#allocation8], 4
      %s52 = int_to_ptr.vmem [resolvable:$true] %s51
      %54 = dma.hbm_to_vmem [thread:$0]  %s3, 144, %s52, [#allocation9]
    $region17: #{tpu_custom_call.1} parent=1 // pred_fallthru
      _
    // Predicated region
    $region18: #{tpu_custom_call.1} parent=1 // pred_check
      _
    $region19: #{tpu_custom_call.1} parent=1 // pred_check_branch
      %56 = sbr.rel (0) target = $region21
    $region20: #{tpu_custom_call.1} parent=1 // pred_region
      %57 = dma.done [#allocation3], 128
    $region21: #{tpu_custom_call.1} parent=1 // pred_fallthru
      _
    // Predicated region
    $region22: #{tpu_custom_call.1} parent=1 // pred_check
      _
    $region23: #{tpu_custom_call.1} parent=1 // pred_check_branch
      %59 = sbr.rel (0) target = $region25
    $region24: #{tpu_custom_call.1} parent=1 // pred_region
      %60 = dma.done [#allocation6], 128
    $region25: #{tpu_custom_call.1} parent=1 // pred_fallthru
      _
    // Predicated region
    $region26: #{tpu_custom_call.1} parent=1 // pred_check
      _
    $region27: #{tpu_custom_call.1} parent=1 // pred_check_branch
      %62 = sbr.rel (0) target = $region29
    $region28: #{tpu_custom_call.1} parent=1 // pred_region
      %63 = dma.done [#allocation6], 12288
    $region29: #{tpu_custom_call.1} parent=1 // pred_fallthru
      _
    // Predicated region
    $region30: #{tpu_custom_call.1} parent=1 // pred_check
      _
    $region31: #{tpu_custom_call.1} parent=1 // pred_check_branch
      %65 = sbr.rel (0) target = $region33
    $region32: #{tpu_custom_call.1} parent=1 // pred_region
      %66 = dma.done [#allocation9], 144
    $region33: #{tpu_custom_call.1} parent=1 // pred_fallthru
      _
    %v67 = vld [vmem:[#allocation2] sm:$0xff]
    %v68 = vld [vmem:[#allocation5] sm:$0xff]
    %v69 = vld [vmem:[#allocation7] sm:$0xff]
    %v70 = vld [vmem:[#allocation7 + $0x30] sm:$0xff]
    %v71 = vld [vmem:[#allocation8 + $0x1] sm:$0x1]
    %73 = vset.pattern.permute.xlu0 0
    %74 = vperm.xlu0 %73, %v68
    %v75 = vpop.permute.xlu0 %74
    %v78 = vlaneseq
    %v79 = vshrl.u32 %v78, 7
    %v80 = vsub.s32 0, %v79
    %v81 = vrot.slane %v71, %v80
    %v83 = vmul.f32 %v75, %v81
    %vm84 = vcmask 130048
    %v86 = vsel %vm84, %v67, 0
    %88 = vmatprep.subr.mxu0 0.0
    %89 = vmatpush1.msra.mxu0 0.0
    %90 = vmatprep.subr.mxu0 0.0
    %91 = vmatpush1.msra.mxu0 0.0
    %92 = vmatprep.subr.mxu0 0.0
    %93 = vmatpush1.msra.mxu0 0.0
    %94 = vmatprep.subr.mxu0 0.0
    %95 = vmatpush1.msra.mxu0 0.0
    %96 = vmatprep.subr.mxu0 0.0
    %97 = vmatpush1.msra.mxu0 0.0
    %98 = vmatprep.subr.mxu0 0.0
    %99 = vmatpush1.msra.mxu0 0.0
    %100 = vmatprep.subr.mxu0 0.0
    %101 = vmatpush1.msra.mxu0 0.0
    %102 = vmatprep.subr.mxu0 0.0
    %103 = vmatpush1.msra.mxu0 0.0
    %104 = vmatprep.subr.mxu0 0.0
    %105 = vmatpush1.msra.mxu0 0.0
    %106 = vmatprep.subr.mxu0 0.0
    %107 = vmatpush1.msra.mxu0 0.0
    %108 = vmatprep.subr.mxu0 0.0
    %109 = vmatpush1.msra.mxu0 0.0
    %110 = vmatprep.subr.mxu0 0.0
    %111 = vmatpush1.msra.mxu0 0.0
    %112 = vmatprep.subr.mxu0 0.0
    %113 = vmatpush1.msra.mxu0 0.0
    %114 = vmatprep.subr.mxu0 0.0
    %115 = vmatpush1.msra.mxu0 0.0
    %116 = vmatprep.subr.mxu0 0.0
    %117 = vmatpush1.msra.mxu0 %v70
    %118 = vmatprep.subr.mxu0 0.0
    %119 = vmatpush1.msra.mxu0 %v69
    %120 = vmatprep.subr.mxu0 0.0
    %121 = vmatpush2.msra.mxu0 0.0
    %122 = vmatprep.subr.mxu0 0.0
    %123 = vmatpush2.msra.mxu0 0.0
    %124 = vmatprep.subr.mxu0 0.0
    %125 = vmatpush2.msra.mxu0 0.0
    %126 = vmatprep.subr.mxu0 0.0
    %127 = vmatpush2.msra.mxu0 0.0
    %128 = vmatprep.subr.mxu0 0.0
    %129 = vmatpush2.msra.mxu0 0.0
    %130 = vmatprep.subr.mxu0 0.0
    %131 = vmatpush2.msra.mxu0 0.0
    %132 = vmatprep.subr.mxu0 0.0
    %133 = vmatpush2.msra.mxu0 0.0
    %134 = vmatprep.subr.mxu0 0.0
    %135 = vmatpush2.msra.mxu0 0.0
    %136 = vmatprep.subr.mxu0 0.0
    %137 = vmatpush2.msra.mxu0 0.0
    %138 = vmatprep.subr.mxu0 0.0
    %139 = vmatpush2.msra.mxu0 0.0
    %140 = vmatprep.subr.mxu0 0.0
    %141 = vmatpush2.msra.mxu0 0.0
    %142 = vmatprep.subr.mxu0 0.0
    %143 = vmatpush2.msra.mxu0 0.0
    %144 = vmatprep.subr.mxu0 0.0
    %145 = vmatpush2.msra.mxu0 0.0
    %146 = vmatprep.subr.mxu0 0.0
    %147 = vmatpush2.msra.mxu0 0.0
    %148 = vmatprep.subr.mxu0 0.0
    %149 = vmatpush2.msra.mxu0 0.0
    %150 = vmatprep.subr.mxu0 0.0
    %151 = vmatpush2.msra.mxu0 0.0
    %152 = vmatprep.mubr.f32.mxu0 0.0
    %153 = vmatmul.mubr.f32.gmra.mxu0 %v86
    %v154 = vpop.f32.mrf.mxu0
    %v155 = vadd.f32 %v83, %v154
    %v156 = vpop.f32.mrf.mxu0
    %157 = vdwg.mxu0
    %v158 = vld [vmem:[#allocation8 + $0x2] sm:$0x1]
    %159 = vset.pattern.permute.xlu0 1
    %160 = vperm.xlu0 %159, %v68
    %v161 = vpop.permute.xlu0 %160
    %v164 = vlaneseq
    %v165 = vshrl.u32 %v164, 7
    %v166 = vsub.s32 0, %v165
    %v167 = vrot.slane %v158, %v166
    %v169 = vmul.f32 %v161, %v167
    %v170 = vadd.f32 %v155, %v169
    %v171 = vld [vmem:[#allocation8] sm:$0x1]
    %v173 = vlaneseq
    %v174 = vshrl.u32 %v173, 7
    %v175 = vsub.s32 0, %v174
    %v176 = vrot.slane %v171, %v175
    %v178 = vadd.f32 %v170, %v176
    %v179 = vmax.f32 %v178, 0.0
    %v180 = vld [vmem:[#allocation7 + $0x8] sm:$0xff]
    %v181 = vld [vmem:[#allocation7 + $0x38] sm:$0xff]
    %v182 = vld [vmem:[#allocation7 + $0x68] sm:$0xff]
    %v183 = vld [vmem:[#allocation7 + $0x98] sm:$0xff]
    %v184 = vld [vmem:[#allocation7 + $0xc8] sm:$0xff]
    %v185 = vld [vmem:[#allocation7 + $0xf8] sm:$0xff]
    %v186 = vld [vmem:[#allocation7 + $0x128] sm:$0xff]
    %v187 = vld [vmem:[#allocation7 + $0x158] sm:$0xff]
    %v188 = vld [vmem:[#allocation7 + $0x188] sm:$0xff]
    %v189 = vld [vmem:[#allocation7 + $0x1b8] sm:$0xff]
    %v190 = vld [vmem:[#allocation7 + $0x1e8] sm:$0xff]
    %v191 = vld [vmem:[#allocation7 + $0x218] sm:$0xff]
    %v192 = vld [vmem:[#allocation7 + $0x248] sm:$0xff]
    %v193 = vld [vmem:[#allocation7 + $0x278] sm:$0xff]
    %v194 = vld [vmem:[#allocation7 + $0x2a8] sm:$0xff]
    %v195 = vld [vmem:[#allocation7 + $0x2d8] sm:$0xff]
    %v196 = vld [vmem:[#allocation8 + $0x3] sm:$0x1]
    %v198 = vlaneseq
    %v199 = vshrl.u32 %v198, 7
    %v200 = vsub.s32 0, %v199
    %v201 = vrot.slane %v196, %v200
    %203 = vmatprep.subr.mxu0 0.0
    %204 = vmatpush1.msra.mxu0 %v195
    %205 = vmatprep.subr.mxu0 0.0
    %206 = vmatpush1.msra.mxu0 %v194
    %207 = vmatprep.subr.mxu0 0.0
    %208 = vmatpush1.msra.mxu0 %v193
    %209 = vmatprep.subr.mxu0 0.0
    %210 = vmatpush1.msra.mxu0 %v192
    %211 = vmatprep.subr.mxu0 0.0
    %212 = vmatpush1.msra.mxu0 %v191
    %213 = vmatprep.subr.mxu0 0.0
    %214 = vmatpush1.msra.mxu0 %v190
    %215 = vmatprep.subr.mxu0 0.0
    %216 = vmatpush1.msra.mxu0 %v189
    %217 = vmatprep.subr.mxu0 0.0
    %218 = vmatpush1.msra.mxu0 %v188
    %219 = vmatprep.subr.mxu0 0.0
    %220 = vmatpush1.msra.mxu0 %v187
    %221 = vmatprep.subr.mxu0 0.0
    %222 = vmatpush1.msra.mxu0 %v186
    %223 = vmatprep.subr.mxu0 0.0
    %224 = vmatpush1.msra.mxu0 %v185
    %225 = vmatprep.subr.mxu0 0.0
    %226 = vmatpush1.msra.mxu0 %v184
    %227 = vmatprep.subr.mxu0 0.0
    %228 = vmatpush1.msra.mxu0 %v183
    %229 = vmatprep.subr.mxu0 0.0
    %230 = vmatpush1.msra.mxu0 %v182
    %231 = vmatprep.subr.mxu0 0.0
    %232 = vmatpush1.msra.mxu0 %v181
    %233 = vmatprep.subr.mxu0 0.0
    %234 = vmatpush1.msra.mxu0 %v180
    %235 = vmatprep.subr.mxu0 0.0
    %236 = vmatpush2.msra.mxu0 0.0
    %237 = vmatprep.subr.mxu0 0.0
    %238 = vmatpush2.msra.mxu0 0.0
    %239 = vmatprep.subr.mxu0 0.0
    %240 = vmatpush2.msra.mxu0 0.0
    %241 = vmatprep.subr.mxu0 0.0
    %242 = vmatpush2.msra.mxu0 0.0
    %243 = vmatprep.subr.mxu0 0.0
    %244 = vmatpush2.msra.mxu0 0.0
    %245 = vmatprep.subr.mxu0 0.0
    %246 = vmatpush2.msra.mxu0 0.0
    %247 = vmatprep.subr.mxu0 0.0
    %248 = vmatpush2.msra.mxu0 0.0
    %249 = vmatprep.subr.mxu0 0.0
    %250 = vmatpush2.msra.mxu0 0.0
    %251 = vmatprep.subr.mxu0 0.0
    %252 = vmatpush2.msra.mxu0 0.0
    %253 = vmatprep.subr.mxu0 0.0
    %254 = vmatpush2.msra.mxu0 0.0
    %255 = vmatprep.subr.mxu0 0.0
    %256 = vmatpush2.msra.mxu0 0.0
    %257 = vmatprep.subr.mxu0 0.0
    %258 = vmatpush2.msra.mxu0 0.0
    %259 = vmatprep.subr.mxu0 0.0
    %260 = vmatpush2.msra.mxu0 0.0
    %261 = vmatprep.subr.mxu0 0.0
    %262 = vmatpush2.msra.mxu0 0.0
    %263 = vmatprep.subr.mxu0 0.0
    %264 = vmatpush2.msra.mxu0 0.0
    %265 = vmatprep.subr.mxu0 0.0
    %266 = vmatpush2.msra.mxu0 0.0
    %267 = vmatprep.mubr.f32.mxu0 0.0
    %268 = vmatmul.mubr.f32.gmra.mxu0 %v179
    %v269 = vpop.f32.mrf.mxu0
    %v270 = vadd.f32 %v201, %v269
    %v271 = vpop.f32.mrf.mxu0
    %272 = vdwg.mxu0
    %v273 = vmax.f32 %v270, 0.0
    %v274 = vld [vmem:[#allocation7 + $0x10] sm:$0xff]
    %v275 = vld [vmem:[#allocation7 + $0x40] sm:$0xff]
    %v276 = vld [vmem:[#allocation7 + $0x70] sm:$0xff]
    %v277 = vld [vmem:[#allocation7 + $0xa0] sm:$0xff]
    %v278 = vld [vmem:[#allocation7 + $0xd0] sm:$0xff]
    %v279 = vld [vmem:[#allocation7 + $0x100] sm:$0xff]
    %v280 = vld [vmem:[#allocation7 + $0x130] sm:$0xff]
    %v281 = vld [vmem:[#allocation7 + $0x160] sm:$0xff]
    %v282 = vld [vmem:[#allocation8 + $0x4] sm:$0x1]
    %v284 = vlaneseq
    %v285 = vshrl.u32 %v284, 7
    %v286 = vsub.s32 0, %v285
    %v287 = vrot.slane %v282, %v286
    %vm289 = vcmask 523264
    %v291 = vsel %vm289, %v273, 0
    %293 = vmatprep.subr.mxu0 0.0
    %294 = vmatpush1.msra.mxu0 0.0
    %295 = vmatprep.subr.mxu0 0.0
    %296 = vmatpush1.msra.mxu0 0.0
    %297 = vmatprep.subr.mxu0 0.0
    %298 = vmatpush1.msra.mxu0 0.0
    %299 = vmatprep.subr.mxu0 0.0
    %300 = vmatpush1.msra.mxu0 0.0
    %301 = vmatprep.subr.mxu0 0.0
    %302 = vmatpush1.msra.mxu0 0.0
    %303 = vmatprep.subr.mxu0 0.0
    %304 = vmatpush1.msra.mxu0 0.0
    %305 = vmatprep.subr.mxu0 0.0
    %306 = vmatpush1.msra.mxu0 0.0
    %307 = vmatprep.subr.mxu0 0.0
    %308 = vmatpush1.msra.mxu0 0.0
    %309 = vmatprep.subr.mxu0 0.0
    %310 = vmatpush1.msra.mxu0 %v281
    %311 = vmatprep.subr.mxu0 0.0
    %312 = vmatpush1.msra.mxu0 %v280
    %313 = vmatprep.subr.mxu0 0.0
    %314 = vmatpush1.msra.mxu0 %v279
    %315 = vmatprep.subr.mxu0 0.0
    %316 = vmatpush1.msra.mxu0 %v278
    %317 = vmatprep.subr.mxu0 0.0
    %318 = vmatpush1.msra.mxu0 %v277
    %319 = vmatprep.subr.mxu0 0.0
    %320 = vmatpush1.msra.mxu0 %v276
    %321 = vmatprep.subr.mxu0 0.0
    %322 = vmatpush1.msra.mxu0 %v275
    %323 = vmatprep.subr.mxu0 0.0
    %324 = vmatpush1.msra.mxu0 %v274
    %325 = vmatprep.subr.mxu0 0.0
    %326 = vmatpush2.msra.mxu0 0.0
    %327 = vmatprep.subr.mxu0 0.0
    %328 = vmatpush2.msra.mxu0 0.0
    %329 = vmatprep.subr.mxu0 0.0
    %330 = vmatpush2.msra.mxu0 0.0
    %331 = vmatprep.subr.mxu0 0.0
    %332 = vmatpush2.msra.mxu0 0.0
    %333 = vmatprep.subr.mxu0 0.0
    %334 = vmatpush2.msra.mxu0 0.0
    %335 = vmatprep.subr.mxu0 0.0
    %336 = vmatpush2.msra.mxu0 0.0
    %337 = vmatprep.subr.mxu0 0.0
    %338 = vmatpush2.msra.mxu0 0.0
    %339 = vmatprep.subr.mxu0 0.0
    %340 = vmatpush2.msra.mxu0 0.0
    %341 = vmatprep.subr.mxu0 0.0
    %342 = vmatpush2.msra.mxu0 0.0
    %343 = vmatprep.subr.mxu0 0.0
    %344 = vmatpush2.msra.mxu0 0.0
    %345 = vmatprep.subr.mxu0 0.0
    %346 = vmatpush2.msra.mxu0 0.0
    %347 = vmatprep.subr.mxu0 0.0
    %348 = vmatpush2.msra.mxu0 0.0
    %349 = vmatprep.subr.mxu0 0.0
    %350 = vmatpush2.msra.mxu0 0.0
    %351 = vmatprep.subr.mxu0 0.0
    %352 = vmatpush2.msra.mxu0 0.0
    %353 = vmatprep.subr.mxu0 0.0
    %354 = vmatpush2.msra.mxu0 0.0
    %355 = vmatprep.subr.mxu0 0.0
    %356 = vmatpush2.msra.mxu0 0.0
    %357 = vmatprep.mubr.f32.mxu0 0.0
    %358 = vmatmul.mubr.f32.gmra.mxu0 %v291
    %v359 = vpop.f32.mrf.mxu0
    %v360 = vadd.f32 %v287, %v359
    %v361 = vpop.f32.mrf.mxu0
    %362 = vdwg.mxu0
    %v363 = vmax.f32 %v360, 0.0
    %v364 = vld [vmem:[#allocation7 + $0x18] sm:$0xff]
    %v365 = vld [vmem:[#allocation7 + $0x48] sm:$0xff]
    %v366 = vld [vmem:[#allocation7 + $0x78] sm:$0xff]
    %v367 = vld [vmem:[#allocation7 + $0xa8] sm:$0xff]
    %v368 = vld [vmem:[#allocation8 + $0x5] sm:$0x1]
    %v370 = vlaneseq
    %v371 = vshrl.u32 %v370, 7
    %v372 = vsub.s32 0, %v371
    %v373 = vrot.slane %v368, %v372
    %vm375 = vcmask 261120
    %v377 = vsel %vm375, %v363, 0
    %379 = vmatprep.subr.mxu0 0.0
    %380 = vmatpush1.msra.mxu0 0.0
    %381 = vmatprep.subr.mxu0 0.0
    %382 = vmatpush1.msra.mxu0 0.0
    %383 = vmatprep.subr.mxu0 0.0
    %384 = vmatpush1.msra.mxu0 0.0
    %385 = vmatprep.subr.mxu0 0.0
    %386 = vmatpush1.msra.mxu0 0.0
    %387 = vmatprep.subr.mxu0 0.0
    %388 = vmatpush1.msra.mxu0 0.0
    %389 = vmatprep.subr.mxu0 0.0
    %390 = vmatpush1.msra.mxu0 0.0
    %391 = vmatprep.subr.mxu0 0.0
    %392 = vmatpush1.msra.mxu0 0.0
    %393 = vmatprep.subr.mxu0 0.0
    %394 = vmatpush1.msra.mxu0 0.0
    %395 = vmatprep.subr.mxu0 0.0
    %396 = vmatpush1.msra.mxu0 0.0
    %397 = vmatprep.subr.mxu0 0.0
    %398 = vmatpush1.msra.mxu0 0.0
    %399 = vmatprep.subr.mxu0 0.0
    %400 = vmatpush1.msra.mxu0 0.0
    %401 = vmatprep.subr.mxu0 0.0
    %402 = vmatpush1.msra.mxu0 0.0
    %403 = vmatprep.subr.mxu0 0.0
    %404 = vmatpush1.msra.mxu0 %v367
    %405 = vmatprep.subr.mxu0 0.0
    %406 = vmatpush1.msra.mxu0 %v366
    %407 = vmatprep.subr.mxu0 0.0
    %408 = vmatpush1.msra.mxu0 %v365
    %409 = vmatprep.subr.mxu0 0.0
    %410 = vmatpush1.msra.mxu0 %v364
    %411 = vmatprep.subr.mxu0 0.0
    %412 = vmatpush2.msra.mxu0 0.0
    %413 = vmatprep.subr.mxu0 0.0
    %414 = vmatpush2.msra.mxu0 0.0
    %415 = vmatprep.subr.mxu0 0.0
    %416 = vmatpush2.msra.mxu0 0.0
    %417 = vmatprep.subr.mxu0 0.0
    %418 = vmatpush2.msra.mxu0 0.0
    %419 = vmatprep.subr.mxu0 0.0
    %420 = vmatpush2.msra.mxu0 0.0
    %421 = vmatprep.subr.mxu0 0.0
    %422 = vmatpush2.msra.mxu0 0.0
    %423 = vmatprep.subr.mxu0 0.0
    %424 = vmatpush2.msra.mxu0 0.0
    %425 = vmatprep.subr.mxu0 0.0
    %426 = vmatpush2.msra.mxu0 0.0
    %427 = vmatprep.subr.mxu0 0.0
    %428 = vmatpush2.msra.mxu0 0.0
    %429 = vmatprep.subr.mxu0 0.0
    %430 = vmatpush2.msra.mxu0 0.0
    %431 = vmatprep.subr.mxu0 0.0
    %432 = vmatpush2.msra.mxu0 0.0
    %433 = vmatprep.subr.mxu0 0.0
    %434 = vmatpush2.msra.mxu0 0.0
    %435 = vmatprep.subr.mxu0 0.0
    %436 = vmatpush2.msra.mxu0 0.0
    %437 = vmatprep.subr.mxu0 0.0
    %438 = vmatpush2.msra.mxu0 0.0
    %439 = vmatprep.subr.mxu0 0.0
    %440 = vmatpush2.msra.mxu0 0.0
    %441 = vmatprep.subr.mxu0 0.0
    %442 = vmatpush2.msra.mxu0 0.0
    %443 = vmatprep.mubr.f32.mxu0 0.0
    %444 = vmatmul.mubr.f32.gmra.mxu0 %v377
    %v445 = vpop.f32.mrf.mxu0
    %v446 = vadd.f32 %v373, %v445
    %v447 = vpop.f32.mrf.mxu0
    %448 = vdwg.mxu0
    %v449 = vmul.f32 %v446, 0.5
    %v450 = vmul.f32 %v449, 1.442695
    %v451 = vpow.pop %v450
    %453 = vrot.lane.b32.xlu0 %v451, 125
    %v454 = vpop.permute.xlu0 %453
    %v456 = vmul.f32 %v68, %v454
    %458 = vrot.lane.b32.xlu0 %v456, 126
    %v459 = vpop.permute.xlu0 %458
    %v461 = vadd.f32 %v446, %v459
    %v462 = vld [vmem:[#allocation7 + $0x20] sm:$0x1f]
    %v463 = vld [vmem:[#allocation8 + $0x6] sm:$0x1]
    %v465 = vlaneseq
    %v466 = vshrl.u32 %v465, 7
    %v467 = vsub.s32 0, %v466
    %v468 = vrot.slane %v463, %v467
    %v470 = vmul.f32 %v75, %v468
    %vm471 = vcmask 39936
    %v473 = vsel %vm471, %v461, 0
    %vm475 = vcmask 1044480
    %v477 = vsel %vm475, %v462, 0
    %479 = vmatprep.subr.mxu0 0.0
    %480 = vmatpush1.msra.mxu0 0.0
    %481 = vmatprep.subr.mxu0 0.0
    %482 = vmatpush1.msra.mxu0 0.0
    %483 = vmatprep.subr.mxu0 0.0
    %484 = vmatpush1.msra.mxu0 0.0
    %485 = vmatprep.subr.mxu0 0.0
    %486 = vmatpush1.msra.mxu0 0.0
    %487 = vmatprep.subr.mxu0 0.0
    %488 = vmatpush1.msra.mxu0 0.0
    %489 = vmatprep.subr.mxu0 0.0
    %490 = vmatpush1.msra.mxu0 0.0
    %491 = vmatprep.subr.mxu0 0.0
    %492 = vmatpush1.msra.mxu0 0.0
    %493 = vmatprep.subr.mxu0 0.0
    %494 = vmatpush1.msra.mxu0 0.0
    %495 = vmatprep.subr.mxu0 0.0
    %496 = vmatpush1.msra.mxu0 0.0
    %497 = vmatprep.subr.mxu0 0.0
    %498 = vmatpush1.msra.mxu0 0.0
    %499 = vmatprep.subr.mxu0 0.0
    %500 = vmatpush1.msra.mxu0 0.0
    %501 = vmatprep.subr.mxu0 0.0
    %502 = vmatpush1.msra.mxu0 0.0
    %503 = vmatprep.subr.mxu0 0.0
    %504 = vmatpush1.msra.mxu0 0.0
    %505 = vmatprep.subr.mxu0 0.0
    %506 = vmatpush1.msra.mxu0 0.0
    %507 = vmatprep.subr.mxu0 0.0
    %508 = vmatpush1.msra.mxu0 0.0
    %509 = vmatprep.subr.mxu0 0.0
    %510 = vmatpush1.msra.mxu0 %v477
    %511 = vmatprep.subr.mxu0 0.0
    %512 = vmatpush2.msra.mxu0 0.0
    %513 = vmatprep.subr.mxu0 0.0
    %514 = vmatpush2.msra.mxu0 0.0
    %515 = vmatprep.subr.mxu0 0.0
    %516 = vmatpush2.msra.mxu0 0.0
    %517 = vmatprep.subr.mxu0 0.0
    %518 = vmatpush2.msra.mxu0 0.0
    %519 = vmatprep.subr.mxu0 0.0
    %520 = vmatpush2.msra.mxu0 0.0
    %521 = vmatprep.subr.mxu0 0.0
    %522 = vmatpush2.msra.mxu0 0.0
    %523 = vmatprep.subr.mxu0 0.0
    %524 = vmatpush2.msra.mxu0 0.0
    %525 = vmatprep.subr.mxu0 0.0
    %526 = vmatpush2.msra.mxu0 0.0
    %527 = vmatprep.subr.mxu0 0.0
    %528 = vmatpush2.msra.mxu0 0.0
    %529 = vmatprep.subr.mxu0 0.0
    %530 = vmatpush2.msra.mxu0 0.0
    %531 = vmatprep.subr.mxu0 0.0
    %532 = vmatpush2.msra.mxu0 0.0
    %533 = vmatprep.subr.mxu0 0.0
    %534 = vmatpush2.msra.mxu0 0.0
    %535 = vmatprep.subr.mxu0 0.0
    %536 = vmatpush2.msra.mxu0 0.0
    %537 = vmatprep.subr.mxu0 0.0
    %538 = vmatpush2.msra.mxu0 0.0
    %539 = vmatprep.subr.mxu0 0.0
    %540 = vmatpush2.msra.mxu0 0.0
    %541 = vmatprep.subr.mxu0 0.0
    %542 = vmatpush2.msra.mxu0 0.0
    %543 = vmatprep.mubr.f32.mxu0 0.0
    %544 = vmatmul.mubr.f32.gmra.mxu0 %v473
    %v545 = vpop.f32.mrf.mxu0
    %v546 = vadd.f32 %v470, %v545
    %v547 = vpop.f32.mrf.mxu0
    %548 = vdwg.mxu0
    %v549 = vld [vmem:[#allocation8 + $0x7] sm:$0x1]
    %v551 = vlaneseq
    %v552 = vshrl.u32 %v551, 7
    %v553 = vsub.s32 0, %v552
    %v554 = vrot.slane %v549, %v553
    %v556 = vadd.f32 %v546, %v554
    %v557 = vmax.f32 %v556, 0.0
    %v558 = vld [vmem:[#allocation7 + $0x28] sm:$0xff]
    %v559 = vld [vmem:[#allocation7 + $0x58] sm:$0xff]
    %v560 = vld [vmem:[#allocation7 + $0x88] sm:$0xff]
    %v561 = vld [vmem:[#allocation7 + $0xb8] sm:$0xff]
    %v562 = vld [vmem:[#allocation7 + $0xe8] sm:$0xff]
    %v563 = vld [vmem:[#allocation7 + $0x118] sm:$0xff]
    %v564 = vld [vmem:[#allocation7 + $0x148] sm:$0xff]
    %v565 = vld [vmem:[#allocation7 + $0x178] sm:$0xf]
    %v566 = vld [vmem:[#allocation8 + $0x8] sm:$0x1]
    %v568 = vlaneseq
    %v569 = vshrl.u32 %v568, 7
    %v570 = vsub.s32 0, %v569
    %v571 = vrot.slane %v566, %v570
    %vm573 = vcmask 490496
    %v575 = vsel %vm573, %v557, 0
    %vm577 = vcmask 1043456
    %v579 = vsel %vm577, %v565, 0
    %581 = vmatprep.subr.mxu0 0.0
    %582 = vmatpush1.msra.mxu0 0.0
    %583 = vmatprep.subr.mxu0 0.0
    %584 = vmatpush1.msra.mxu0 0.0
    %585 = vmatprep.subr.mxu0 0.0
    %586 = vmatpush1.msra.mxu0 0.0
    %587 = vmatprep.subr.mxu0 0.0
    %588 = vmatpush1.msra.mxu0 0.0
    %589 = vmatprep.subr.mxu0 0.0
    %590 = vmatpush1.msra.mxu0 0.0
    %591 = vmatprep.subr.mxu0 0.0
    %592 = vmatpush1.msra.mxu0 0.0
    %593 = vmatprep.subr.mxu0 0.0
    %594 = vmatpush1.msra.mxu0 0.0
    %595 = vmatprep.subr.mxu0 0.0
    %596 = vmatpush1.msra.mxu0 0.0
    %597 = vmatprep.subr.mxu0 0.0
    %598 = vmatpush1.msra.mxu0 %v579
    %599 = vmatprep.subr.mxu0 0.0
    %600 = vmatpush1.msra.mxu0 %v564
    %601 = vmatprep.subr.mxu0 0.0
    %602 = vmatpush1.msra.mxu0 %v563
    %603 = vmatprep.subr.mxu0 0.0
    %604 = vmatpush1.msra.mxu0 %v562
    %605 = vmatprep.subr.mxu0 0.0
    %606 = vmatpush1.msra.mxu0 %v561
    %607 = vmatprep.subr.mxu0 0.0
    %608 = vmatpush1.msra.mxu0 %v560
    %609 = vmatprep.subr.mxu0 0.0
    %610 = vmatpush1.msra.mxu0 %v559
    %611 = vmatprep.subr.mxu0 0.0
    %612 = vmatpush1.msra.mxu0 %v558
    %613 = vmatprep.subr.mxu0 0.0
    %614 = vmatpush2.msra.mxu0 0.0
    %615 = vmatprep.subr.mxu0 0.0
    %616 = vmatpush2.msra.mxu0 0.0
    %617 = vmatprep.subr.mxu0 0.0
    %618 = vmatpush2.msra.mxu0 0.0
    %619 = vmatprep.subr.mxu0 0.0
    %620 = vmatpush2.msra.mxu0 0.0
    %621 = vmatprep.subr.mxu0 0.0
    %622 = vmatpush2.msra.mxu0 0.0
    %623 = vmatprep.subr.mxu0 0.0
    %624 = vmatpush2.msra.mxu0 0.0
    %625 = vmatprep.subr.mxu0 0.0
    %626 = vmatpush2.msra.mxu0 0.0
    %627 = vmatprep.subr.mxu0 0.0
    %628 = vmatpush2.msra.mxu0 0.0
    %629 = vmatprep.subr.mxu0 0.0
    %630 = vmatpush2.msra.mxu0 0.0
    %631 = vmatprep.subr.mxu0 0.0
    %632 = vmatpush2.msra.mxu0 0.0
    %633 = vmatprep.subr.mxu0 0.0
    %634 = vmatpush2.msra.mxu0 0.0
    %635 = vmatprep.subr.mxu0 0.0
    %636 = vmatpush2.msra.mxu0 0.0
    %637 = vmatprep.subr.mxu0 0.0
    %638 = vmatpush2.msra.mxu0 0.0
    %639 = vmatprep.subr.mxu0 0.0
    %640 = vmatpush2.msra.mxu0 0.0
    %641 = vmatprep.subr.mxu0 0.0
    %642 = vmatpush2.msra.mxu0 0.0
    %643 = vmatprep.subr.mxu0 0.0
    %644 = vmatpush2.msra.mxu0 0.0
    %645 = vmatprep.mubr.f32.mxu0 0.0
    %646 = vmatmul.mubr.f32.gmra.mxu0 %v575
    %v647 = vpop.f32.mrf.mxu0
    %v648 = vadd.f32 %v571, %v647
    %v649 = vpop.f32.mrf.mxu0
    %650 = vdwg.mxu0
    %v651 = vlaneseq
    %v652 = vand.u32 %v651, 127
    %v653 = vsub.f32 0.0, %v648
    %v654 = vmul.f32 %v653, 1.442695
    %v655 = vpow.pop %v654
    %v656 = vadd.f32 %v655, 1.0
    %v657 = vrcp.pop %v656
    %vm658 = vcmp.lt.s32.totalorder %v652, 16
    %v659 = vsel %vm658, %v657, %v648
    %660 = vrot.lane.b32.xlu0 %v461, 17
    %v661 = vpop.permute.xlu0 %660
    %664 = vrot.lane.b32.xlu0 %v446, 22
    %v665 = vpop.permute.xlu0 %664
    %vm667 = vcmask 138240
    %v668 = vsel %vm667, %v659, %v661
    %vm669 = vcmask 179200
    %v670 = vsel %vm669, %v668, %v665
    %671 = vst.msk [vmem:[#allocation10] sm:$0xff] %vm375, %v670
    // Predicated region
    $region34: #{tpu_custom_call.1} parent=1 // pred_check
      _
    $region35: #{tpu_custom_call.1} parent=1 // pred_check_branch
      %673 = sbr.rel (0) target = $region37
    $region36: #{tpu_custom_call.1} parent=1 // pred_region
      %s675 = ssub.s32 128, 128
      %676 = vsyncadd [#allocation4], %s675
      %s678 = sshll.u32 [#allocation10], 4
      %s679 = int_to_ptr.vmem [resolvable:$true] %s678
      %681 = dma.vmem_to_hbm [thread:$0]  %s679, 128, %s4, [#allocation4]
    $region37: #{tpu_custom_call.1} parent=1 // pred_fallthru
      _
    // Predicated region
    $region38: #{tpu_custom_call.1} parent=1 // pred_check
      _
    $region39: #{tpu_custom_call.1} parent=1 // pred_check_branch
      %683 = sbr.rel (0) target = $region41
    $region40: #{tpu_custom_call.1} parent=1 // pred_region
      %684 = dma.done [#allocation4], 128
    $region41: #{tpu_custom_call.1} parent=1 // pred_fallthru
      _
    %685 = vsyncpa [#allocation3], 1
    %686 = vsyncpa [#allocation6], 1
    %687 = vsyncpa [#allocation9], 1
    %688 = vsyncpa [#allocation4], 1

</llo_original>
